<compile_context>
chip_gen: v5e
topology: v5e:2x2
jax: 0.10.0
libtpu: 0.0.40
codegen_flags: <defaults>
</compile_context>

<pallas_src>
import math
import jax
import jax.numpy as jnp
from jax.experimental import pallas as pl
from jax.experimental.pallas import tpu as pltpu


def _round_up(x, m):
    return ((x + m - 1) // m) * m


def _pick_hidden_tile(hidden, target, multiple=128):
    """Largest divisor of `hidden` that is <= target and a multiple of
    `multiple`; falls back to `hidden` itself (single chunk)."""
    best = None
    upper = min(target, hidden)
    for cand in range(multiple, upper + 1, multiple):
        if hidden % cand == 0:
            best = cand
    return best if best is not None else hidden


def gpt_mlp_kernel(x_ref, w1_ref, b1_ref, w2_ref, b2_ref, o_ref, acc_ref):
    # x_ref:  (tm, n_embd)        bf16   (resident across hidden chunks)
    # w1_ref: (th, n_embd)        bf16   c_fc weight rows (PyTorch (out,in) layout)
    # b1_ref: (1, th)             f32    c_fc bias chunk
    # w2_ref: (n_embd, th)        bf16   c_proj weight cols (PyTorch layout)
    # b2_ref: (1, n_embd)         f32    c_proj bias
    # o_ref:  (tm, n_embd)        x.dtype
    # acc_ref:(tm, n_embd)        f32    scratch accumulator
    h_idx = pl.program_id(1)

    @pl.when(h_idx == 0)
    def _():
        acc_ref[...] = jnp.zeros_like(acc_ref)

    # c_fc chunk:  x @ W_fc[chunk]^T + b_fc[chunk]   (bf16 MXU, f32 accumulate)
    h = jax.lax.dot_general(
        x_ref[...], w1_ref[...],
        dimension_numbers=(((1,), (1,)), ((), ())),
        preferred_element_type=jnp.float32,
    )
    h = h + b1_ref[...]

    # exact GELU (nn.GELU default): 0.5 * x * (1 + erf(x / sqrt(2)))
    inv_sqrt2 = jnp.float32(1.0 / math.sqrt(2.0))
    h = 0.5 * h * (1.0 + jax.lax.erf(h * inv_sqrt2))

    # c_proj partial:  acc += gelu_chunk @ W_proj[:, chunk]^T
    acc_ref[...] += jax.lax.dot_general(
        h.astype(w2_ref.dtype), w2_ref[...],
        dimension_numbers=(((1,), (1,)), ((), ())),
        preferred_element_type=jnp.float32,
    )

    @pl.when(h_idx == pl.num_programs(1) - 1)
    def _():
        # Dropout is identity in eval mode.
        o_ref[...] = (acc_ref[...] + b2_ref[...]).astype(o_ref.dtype)


def gpt_mlp(x, w_fc, b_fc, w_proj, b_proj, *, tm=256, th=512,
            compute_dtype=jnp.bfloat16):
    """x: (B, T, n_embd); weights in PyTorch nn.Linear (out, in) layout."""
    B, T, n_embd = x.shape
    hidden = w_fc.shape[0]
    assert w_fc.shape == (hidden, n_embd)
    assert b_fc.shape == (hidden,)
    assert w_proj.shape == (n_embd, hidden)
    assert b_proj.shape == (n_embd,)

    M = B * T
    # Row tile: multiple of 16 (bf16 sublane packing), capped at target `tm`.
    tm_eff = min(tm, _round_up(M, 16))
    M_pad = _round_up(M, tm_eff)
    # Hidden-chunk tile: multiple of 128 lanes, divides `hidden`.
    th_eff = _pick_hidden_tile(hidden, th)

    x2d = x.reshape(M, n_embd).astype(compute_dtype)
    if M_pad != M:
        x2d = jnp.pad(x2d, ((0, M_pad - M), (0, 0)))

    # Keep PyTorch (out, in) layout — no per-call transpose copy in HBM.
    w1 = w_fc.astype(compute_dtype)                    # (hidden, n_embd)
    w2 = w_proj.astype(compute_dtype)                  # (n_embd, hidden)
    b1 = b_fc.reshape(1, hidden).astype(jnp.float32)
    b2 = b_proj.reshape(1, n_embd).astype(jnp.float32)

    grid = (M_pad // tm_eff, hidden // th_eff)

    out2d = pl.pallas_call(
        gpt_mlp_kernel,
        out_shape=jax.ShapeDtypeStruct((M_pad, n_embd), x.dtype),
        grid_spec=pltpu.PrefetchScalarGridSpec(
            num_scalar_prefetch=0,
            grid=grid,
            in_specs=[
                # x row tile: block index constant across the hidden axis ->
                # stays resident (no re-DMA per hidden chunk).
                pl.BlockSpec((tm_eff, n_embd), lambda i, h: (i, 0)),
                # c_fc weight rows for this hidden chunk.
                pl.BlockSpec((th_eff, n_embd), lambda i, h: (h, 0)),
                # c_fc bias chunk.
                pl.BlockSpec((1, th_eff), lambda i, h: (0, h)),
                # c_proj weight columns for this hidden chunk.
                pl.BlockSpec((n_embd, th_eff), lambda i, h: (0, h)),
                # c_proj bias (constant).
                pl.BlockSpec((1, n_embd), lambda i, h: (0, 0)),
            ],
            out_specs=pl.BlockSpec((tm_eff, n_embd), lambda i, h: (i, 0)),
            scratch_shapes=[pltpu.VMEM((tm_eff, n_embd), jnp.float32)],
        ),
        compiler_params=pltpu.CompilerParams(
            dimension_semantics=("parallel", "arbitrary"),
            vmem_limit_bytes=48 * 1024 * 1024,
        ),
    )(x2d, w1, b1, w2, b2)

    return out2d[:M].reshape(B, T, n_embd)


def gpt_mlp_ref(x, w_fc, b_fc, w_proj, b_proj, compute_dtype=None):
    """Plain-JAX reference. If compute_dtype is given, emulate the kernel's
    bf16-operand / f32-accumulate arithmetic."""
    if compute_dtype is not None:
        xc, w1, w2 = (x.astype(compute_dtype), w_fc.astype(compute_dtype),
                      w_proj.astype(compute_dtype))
    else:
        xc, w1, w2 = x, w_fc, w_proj
    h = jnp.einsum("btd,hd->bth", xc, w1,
                   preferred_element_type=jnp.float32) + b_fc.astype(jnp.float32)
    h = jax.nn.gelu(h, approximate=False)
    if compute_dtype is not None:
        h = h.astype(compute_dtype)
    out = jnp.einsum("bth,dh->btd", h, w2,
                     preferred_element_type=jnp.float32) + b_proj.astype(jnp.float32)
    return out.astype(x.dtype)


if __name__ == "__main__":
    # Small config consistent with the module: batch=2, seq=8, n_embd=32,
    # hidden = 4 * n_embd = 128, bias=True, dropout=0.0 (eval).
    B, T, n_embd = 2, 8, 32
    hidden = 4 * n_embd

    key = jax.random.PRNGKey(0)
    kx, k1, k2, k3, k4 = jax.random.split(key, 5)

    x = jax.random.normal(kx, (B, T, n_embd), dtype=jnp.float32)
    w_fc = jax.random.normal(k1, (hidden, n_embd), dtype=jnp.float32) * (1.0 / math.sqrt(n_embd))
    b_fc = jax.random.normal(k2, (hidden,), dtype=jnp.float32) * 0.01
    w_proj = jax.random.normal(k3, (n_embd, hidden), dtype=jnp.float32) * (1.0 / math.sqrt(hidden))
    b_proj = jax.random.normal(k4, (n_embd,), dtype=jnp.float32) * 0.01

    out = gpt_mlp(x, w_fc, b_fc, w_proj, b_proj)
    out = jax.block_until_ready(out)
    assert out.shape == (B, T, n_embd)

    # Tight check against a reference using the same bf16-operand arithmetic.
    ref_bf16 = gpt_mlp_ref(x, w_fc, b_fc, w_proj, b_proj,
                           compute_dtype=jnp.bfloat16)
    err_bf16 = jnp.max(jnp.abs(out - ref_bf16))
    assert jnp.allclose(out, ref_bf16, atol=2e-2, rtol=2e-2), \
        f"max abs err vs bf16-matched ref: {err_bf16}"

    # Loose sanity check against the exact f32 PyTorch-equivalent math.
    ref_f32 = gpt_mlp_ref(x, w_fc, b_fc, w_proj, b_proj)
    err_f32 = jnp.max(jnp.abs(out - ref_f32))
    assert jnp.allclose(out, ref_f32, atol=1e-1, rtol=1e-1), \
        f"max abs err vs f32 ref: {err_f32}"

    print("KERNEL_OK")
</pallas_src>

<mosaic_0001>
module attributes {stable_mosaic.version = 11 : i64} {
  func.func @gpt_mlp_kernel(%arg0: i32, %arg1: i32, %arg2: memref<16x32xbf16, #tpu.memory_space<vmem>>, %arg3: memref<128x32xbf16, #tpu.memory_space<vmem>>, %arg4: memref<1x128xf32, #tpu.memory_space<vmem>>, %arg5: memref<32x128xbf16, #tpu.memory_space<vmem>>, %arg6: memref<1x32xf32, #tpu.memory_space<vmem>>, %arg7: memref<16x32xf32, #tpu.memory_space<vmem>>, %arg8: memref<16x32xf32, #tpu.memory_space<vmem>>) attributes {dimension_semantics = [#tpu.dimension_semantics<parallel>, #tpu.dimension_semantics<arbitrary>], iteration_bounds = array<i64: 1, 1>, scalar_prefetch = 0 : i64, scratch_operands = 1 : i64, tpu.core_type = #tpu.core_type<tc>, window_params = [{transform_indices = @transform_0, window_bounds = array<i64: 16, 32>}, {transform_indices = @transform_1, window_bounds = array<i64: 128, 32>}, {transform_indices = @transform_2, window_bounds = array<i64: 1, 128>}, {transform_indices = @transform_3, window_bounds = array<i64: 32, 128>}, {pipeline_mode = #tpu.pipeline_mode<synchronous>, transform_indices = @transform_4, window_bounds = array<i64: 1, 32>}, {transform_indices = @transform_5, window_bounds = array<i64: 16, 32>}]} {
    %c0_i32 = arith.constant 0 : i32
    %0 = arith.cmpi eq, %arg1, %c0_i32 : i32
    %1 = arith.extui %0 : i1 to i32
    %c0_i32_0 = arith.constant 0 : i32
    %2 = arith.cmpi ne, %1, %c0_i32_0 : i32
    scf.if %2 {
      %cst_18 = arith.constant 0.000000e+00 : f32
      %26 = vector.broadcast %cst_18 : f32 to vector<16x32xf32>
      %c0_19 = arith.constant 0 : index
      %c0_20 = arith.constant 0 : index
      %27 = vector.load %arg8[%c0_19, %c0_20] : memref<16x32xf32, #tpu.memory_space<vmem>>, vector<16x32xf32>
      tpu.vector_store %arg8[%c0_19, %c0_20], %26 {strides = array<i32>} : memref<16x32xf32, #tpu.memory_space<vmem>>, vector<16x32xf32>,
    } else {
    }
    %c0 = arith.constant 0 : index
    %c0_1 = arith.constant 0 : index
    %3 = vector.load %arg2[%c0, %c0_1] : memref<16x32xbf16, #tpu.memory_space<vmem>>, vector<16x32xbf16>
    %c0_2 = arith.constant 0 : index
    %c0_3 = arith.constant 0 : index
    %4 = vector.load %arg3[%c0_2, %c0_3] : memref<128x32xbf16, #tpu.memory_space<vmem>>, vector<128x32xbf16>
    %cst = arith.constant dense<0.000000e+00> : vector<16x128xf32>
    %5 = tpu.matmul %3, %4, %cst {dimension_numbers = #tpu.dot_dimension_numbers<[1], [1], [0], [0], [0, 0, 1, 0], [], []>} : vector<16x32xbf16>, vector<128x32xbf16>, vector<16x128xf32> -> vector<16x128xf32>
    %c0_4 = arith.constant 0 : index
    %c0_5 = arith.constant 0 : index
    %6 = vector.load %arg4[%c0_4, %c0_5] : memref<1x128xf32, #tpu.memory_space<vmem>>, vector<1x128xf32>
    %7 = vector.broadcast %6 : vector<1x128xf32> to vector<16x128xf32>
    %8 = arith.addf %5, %7 : vector<16x128xf32>
    %cst_6 = arith.constant 5.000000e-01 : f32
    %9 = vector.broadcast %cst_6 : f32 to vector<16x128xf32>
    %10 = arith.mulf %9, %8 : vector<16x128xf32>
    %cst_7 = arith.constant 0.707106769 : f32
    %11 = vector.broadcast %cst_7 : f32 to vector<16x128xf32>
    %12 = arith.mulf %8, %11 : vector<16x128xf32>
    %13 = math.erf %12 : vector<16x128xf32>
    %cst_8 = arith.constant 1.000000e+00 : f32
    %14 = vector.broadcast %cst_8 : f32 to vector<16x128xf32>
    %15 = arith.addf %14, %13 : vector<16x128xf32>
    %16 = arith.mulf %10, %15 : vector<16x128xf32>
    %c0_9 = arith.constant 0 : index
    %c0_10 = arith.constant 0 : index
    %17 = vector.load %arg8[%c0_9, %c0_10] : memref<16x32xf32, #tpu.memory_space<vmem>>, vector<16x32xf32>
    %18 = arith.truncf %16 : vector<16x128xf32> to vector<16x128xbf16>
    %c0_11 = arith.constant 0 : index
    %c0_12 = arith.constant 0 : index
    %19 = vector.load %arg5[%c0_11, %c0_12] : memref<32x128xbf16, #tpu.memory_space<vmem>>, vector<32x128xbf16>
    %cst_13 = arith.constant dense<0.000000e+00> : vector<16x32xf32>
    %20 = tpu.matmul %18, %19, %cst_13 {dimension_numbers = #tpu.dot_dimension_numbers<[1], [1], [0], [0], [0, 0, 1, 0], [], []>} : vector<16x128xbf16>, vector<32x128xbf16>, vector<16x32xf32> -> vector<16x32xf32>
    %21 = arith.addf %17, %20 : vector<16x32xf32>
    %c0_14 = arith.constant 0 : index
    %c0_15 = arith.constant 0 : index
    %22 = vector.load %arg8[%c0_14, %c0_15] : memref<16x32xf32, #tpu.memory_space<vmem>>, vector<16x32xf32>
    tpu.vector_store %arg8[%c0_14, %c0_15], %21 {strides = array<i32>} : memref<16x32xf32, #tpu.memory_space<vmem>>, vector<16x32xf32>,
    %c0_i32_16 = arith.constant 0 : i32
    %23 = arith.cmpi eq, %arg1, %c0_i32_16 : i32
    %24 = arith.extui %23 : i1 to i32
    %c0_i32_17 = arith.constant 0 : i32
    %25 = arith.cmpi ne, %24, %c0_i32_17 : i32
    scf.if %25 {
      %c0_18 = arith.constant 0 : index
      %c0_19 = arith.constant 0 : index
      %26 = vector.load %arg8[%c0_18, %c0_19] : memref<16x32xf32, #tpu.memory_space<vmem>>, vector<16x32xf32>
      %c0_20 = arith.constant 0 : index
      %c0_21 = arith.constant 0 : index
      %27 = vector.load %arg6[%c0_20, %c0_21] : memref<1x32xf32, #tpu.memory_space<vmem>>, vector<1x32xf32>
      %28 = vector.broadcast %27 : vector<1x32xf32> to vector<16x32xf32>
      %29 = arith.addf %26, %28 : vector<16x32xf32>
      %c0_22 = arith.constant 0 : index
      %c0_23 = arith.constant 0 : index
      %30 = vector.load %arg7[%c0_22, %c0_23] : memref<16x32xf32, #tpu.memory_space<vmem>>, vector<16x32xf32>
      tpu.vector_store %arg7[%c0_22, %c0_23], %29 {strides = array<i32>} : memref<16x32xf32, #tpu.memory_space<vmem>>, vector<16x32xf32>,
    } else {
    }
    return
  }
  func.func @transform_0(%arg0: i32, %arg1: i32) -> (i32, i32) {
    %c0_i32 = arith.constant 0 : i32
    %c0_i32_0 = arith.constant 0 : i32
    return %arg0, %c0_i32 : i32, i32
  }
  func.func @transform_1(%arg0: i32, %arg1: i32) -> (i32, i32) {
    %c0_i32 = arith.constant 0 : i32
    %c0_i32_0 = arith.constant 0 : i32
    return %arg1, %c0_i32 : i32, i32
  }
  func.func @transform_2(%arg0: i32, %arg1: i32) -> (i32, i32) {
    %c0_i32 = arith.constant 0 : i32
    %c0_i32_0 = arith.constant 0 : i32
    return %c0_i32, %arg1 : i32, i32
  }
  func.func @transform_3(%arg0: i32, %arg1: i32) -> (i32, i32) {
    %c0_i32 = arith.constant 0 : i32
    %c0_i32_0 = arith.constant 0 : i32
    return %c0_i32, %arg1 : i32, i32
  }
  func.func @transform_4(%arg0: i32, %arg1: i32) -> (i32, i32) {
    %c0_i32 = arith.constant 0 : i32
    %c0_i32_0 = arith.constant 0 : i32
    %c0_i32_1 = arith.constant 0 : i32
    return %c0_i32, %c0_i32_0 : i32, i32
  }
  func.func @transform_5(%arg0: i32, %arg1: i32) -> (i32, i32) {
    %c0_i32 = arith.constant 0 : i32
    %c0_i32_0 = arith.constant 0 : i32
    return %arg0, %c0_i32 : i32, i32
  }
}

</mosaic_0001>

<llo_original>
// kernel: tpu_custom_call.1
$region0: #{tpu_custom_call.1}
  #allocation0 [shape = 'u32[]', space=smem, size = 0x4, offset = 0x4, fixed_abs, tag = 'smem constant byte address 0x4 - core index']
  #allocation1 [shape = 'u32[72,128]{1,0:T(1,128)}', space=vmem, size = 0x9000, scoped, tag = 'internal scratch']
  #allocation2 [shape = 'f32[16,32]{1,0:T(8,128)}', space=vmem, size = 0x2000, scoped, tag = 'scratch operand']
  %s0 = inlined_call_operand.vmem [shape: bf16[16,32], index: 0, kind: input, shape index: {}]
  %s1 = inlined_call_operand.vmem [shape: bf16[128,32], index: 1, kind: input, shape index: {}]
  %s2 = inlined_call_operand.vmem [shape: f32[1,128], index: 2, kind: input, shape index: {}]
  %s3 = inlined_call_operand.vmem [shape: bf16[32,128], index: 3, kind: input, shape index: {}]
  %s4 = inlined_call_operand.vmem [shape: f32[1,32], index: 4, kind: input, shape index: {}]
  %s5 = inlined_call_operand.hbm [shape: f32[16,32], index: 5, kind: output, shape index: {}]
  %s6 = sld [smem:[#allocation0]]
  $region38: #{tpu_custom_call.1} parent=0
    _
  %s8 = ssub.s32 1, %s6
  %s9 = scalar_select 0, %s8, %s6
  $region1: #{tpu_custom_call.1} parent=0
    #allocation3 [shape = 'u8[8192]{0}', space=vmem, size = 0x2000, scoped, tag = 'output window, operand 0, single buffered']
    #allocation4 [shape = 's32[1]{0}', space=sflag, size = 0x4, scoped, tag = 'scoped memory for tpu_custom_call.1']
    %10 = vsyncpa [#allocation4], 0
    // Predicated region
    $region2: #{tpu_custom_call.1} parent=1 // pred_check
      _
    $region3: #{tpu_custom_call.1} parent=1 // pred_check_branch
      %12 = sbr.rel (0) target = $region5
    $region4: #{tpu_custom_call.1} parent=1 // pred_region
      _
    $region5: #{tpu_custom_call.1} parent=1 // pred_fallthru
      _
    // Predicated region
    $region6: #{tpu_custom_call.1} parent=1 // pred_check
      _
    $region7: #{tpu_custom_call.1} parent=1 // pred_check_branch
      %14 = sbr.rel (0) target = $region9
    $region8: #{tpu_custom_call.1} parent=1 // pred_region
      _
    $region9: #{tpu_custom_call.1} parent=1 // pred_fallthru
      _
    // Predicated region
    $region10: #{tpu_custom_call.1} parent=1 // pred_check
      _
    $region11: #{tpu_custom_call.1} parent=1 // pred_check_branch
      %16 = sbr.rel (0) target = $region13
    $region12: #{tpu_custom_call.1} parent=1 // pred_region
      _
    $region13: #{tpu_custom_call.1} parent=1 // pred_fallthru
      _
    // Predicated region
    $region14: #{tpu_custom_call.1} parent=1 // pred_check
      _
    $region15: #{tpu_custom_call.1} parent=1 // pred_check_branch
      %18 = sbr.rel (0) target = $region17
    $region16: #{tpu_custom_call.1} parent=1 // pred_region
      _
    $region17: #{tpu_custom_call.1} parent=1 // pred_fallthru
      _
    // Predicated region
    $region18: #{tpu_custom_call.1} parent=1 // pred_check
      _
    $region19: #{tpu_custom_call.1} parent=1 // pred_check_branch
      %20 = sbr.rel (0) target = $region21
    $region20: #{tpu_custom_call.1} parent=1 // pred_region
      _
    $region21: #{tpu_custom_call.1} parent=1 // pred_fallthru
      _
    %p22 = scmp.eq.s32.totalorder 0, 0
    // Predicated region
    $region22: #{tpu_custom_call.1} parent=1 // pred_check
      %p23 = pneg %p22
    $region23: #{tpu_custom_call.1} parent=1 // pred_check_branch
      %25 = sbr.rel (%p23) target = $region25
    $region24: #{tpu_custom_call.1} parent=1 // pred_region
      %vm26 = vcmask 261120
      %27 = vst.msk [vmem:[#allocation2] sm:$0xff] %vm26, 0.0
      %28 = vst.msk [vmem:[#allocation2 + $0x8] sm:$0xff] %vm26, 0.0
    $region25: #{tpu_custom_call.1} parent=1 // pred_fallthru
      _
    %v29 = vld [vmem:[%s0] sm:$0xf]
    %v30 = vld [vmem:[%s0 + $0x4] sm:$0xf]
    %v31 = vld [vmem:[%s1] sm:$0xf]
    %v32 = vld [vmem:[%s1 + $0x4] sm:$0xf]
    %v33 = vld [vmem:[%s1 + $0x8] sm:$0xf]
    %v34 = vld [vmem:[%s1 + $0xc] sm:$0xf]
    %v35 = vld [vmem:[%s1 + $0x10] sm:$0xf]
    %v36 = vld [vmem:[%s1 + $0x14] sm:$0xf]
    %v37 = vld [vmem:[%s1 + $0x18] sm:$0xf]
    %v38 = vld [vmem:[%s1 + $0x1c] sm:$0xf]
    %v39 = vld [vmem:[%s1 + $0x20] sm:$0xf]
    %v40 = vld [vmem:[%s1 + $0x24] sm:$0xf]
    %v41 = vld [vmem:[%s1 + $0x28] sm:$0xf]
    %v42 = vld [vmem:[%s1 + $0x2c] sm:$0xf]
    %v43 = vld [vmem:[%s1 + $0x30] sm:$0xf]
    %v44 = vld [vmem:[%s1 + $0x34] sm:$0xf]
    %v45 = vld [vmem:[%s1 + $0x38] sm:$0xf]
    %v46 = vld [vmem:[%s1 + $0x3c] sm:$0xf]
    %v47 = vld [vmem:[%s2] sm:$0x1]
    %v49 = vperm.slane %v47, 0
    %v53 = vunpack.c.l.b16 %v29
    %v54 = vunpack.c.l.b16 %v30
    %v55 = vpack.c.b16 %v54, %v53
    %v72 = vunpack.c.l.b16 %v31
    %v73 = vunpack.c.l.b16 %v32
    %v74 = vunpack.c.l.b16 %v33
    %v75 = vunpack.c.l.b16 %v34
    %v76 = vunpack.c.l.b16 %v35
    %v77 = vunpack.c.l.b16 %v36
    %v78 = vunpack.c.l.b16 %v37
    %v79 = vunpack.c.l.b16 %v38
    %v80 = vunpack.c.l.b16 %v39
    %v81 = vunpack.c.l.b16 %v40
    %v82 = vunpack.c.l.b16 %v41
    %v83 = vunpack.c.l.b16 %v42
    %v84 = vunpack.c.l.b16 %v43
    %v85 = vunpack.c.l.b16 %v44
    %v86 = vunpack.c.l.b16 %v45
    %v87 = vunpack.c.l.b16 %v46
    %v88 = vpack.c.b16 %v73, %v72
    %v89 = vpack.c.b16 %v75, %v74
    %v90 = vpack.c.b16 %v77, %v76
    %v91 = vpack.c.b16 %v79, %v78
    %v92 = vpack.c.b16 %v81, %v80
    %v93 = vpack.c.b16 %v83, %v82
    %v94 = vpack.c.b16 %v85, %v84
    %v95 = vpack.c.b16 %v87, %v86
    %vm96 = vcmask 261120
    %v98 = vsel %vm96, %v55, 0
    %v101 = vsel %vm96, %v88, 0
    %v104 = vsel %vm96, %v89, 0
    %v107 = vsel %vm96, %v90, 0
    %v110 = vsel %vm96, %v91, 0
    %v113 = vsel %vm96, %v92, 0
    %v116 = vsel %vm96, %v93, 0
    %v119 = vsel %vm96, %v94, 0
    %v122 = vsel %vm96, %v95, 0
    %124 = vmatpush.bf16.xpose.msra.mxu0 %v122
    %125 = vmatpush.bf16.xpose.msra.mxu0 %v119
    %126 = vmatpush.bf16.xpose.msra.mxu0 %v116
    %127 = vmatpush.bf16.xpose.msra.mxu0 %v113
    %128 = vmatpush.bf16.xpose.msra.mxu0 %v110
    %129 = vmatpush.bf16.xpose.msra.mxu0 %v107
    %130 = vmatpush.bf16.xpose.msra.mxu0 %v104
    %131 = vmatpush.bf16.xpose.msra.mxu0 %v101
    %132 = vmatmul.bf16.gmra.mxu0 %v98
    %v133 = vpop.f32.mrf.mxu0
    %v134 = vadd.f32 %v49, %v133
    %v135 = vpop.f32.mrf.mxu0
    %v136 = vadd.f32 %v49, %v135
    %137 = vdwg.mxu0
    %v138 = vmul.f32 %v134, 0.5
    %v139 = vmul.f32 %v136, 0.5
    %v140 = vmul.f32 %v134, 0.70710677
    %v141 = vmul.f32 %v136, 0.70710677
    %v142 = vmul.f32 %v140, %v140
    %v143 = vmin.f32 16.0, %v142
    %v144 = vmul.f32 %v143, 2.1237322e-06
    %v145 = vadd.f32 %v144, 0.00028619796
    %v146 = vmul.f32 %v143, %v145
    %v147 = vadd.f32 %v146, 0.0036580483
    %v148 = vmul.f32 %v143, %v147
    %v149 = vadd.f32 %v148, 0.05243302
    %v150 = vmul.f32 %v143, %v149
    %v151 = vadd.f32 %v150, 0.18741608
    %v152 = vmul.f32 %v143, %v151
    %v153 = vadd.f32 %v152, 1.1283791
    %v154 = vmul.f32 %v140, %v153
    %v155 = vmul.f32 %v143, 3.8918573e-05
    %v156 = vadd.f32 %v155, 0.001143296
    %v157 = vmul.f32 %v143, %v156
    %v158 = vadd.f32 %v157, 0.014752088
    %v159 = vmul.f32 %v143, %v158
    %v160 = vadd.f32 %v159, 0.112945676
    %v161 = vmul.f32 %v143, %v160
    %v162 = vadd.f32 %v161, 0.4994258
    %v163 = vmul.f32 %v143, %v162
    %v164 = vadd.f32 %v163, 1.0
    %v165 = vrcp.pop %v164
    %v166 = vmul.f32 %v164, %v165
    %v167 = vsub.f32 1.0, %v166
    %v168 = vmul.f32 %v165, %v167
    %v169 = vadd.f32 %v165, %v168
    %vm170 = vweird.f32 %v164
    %vm171 = vweird.f32 %v165
    %vm172 = vmor %vm170, %vm171
    %v173 = vsel %vm172, %v165, %v169
    %v174 = vand.u32 2147483647, %v164
    %vm175 = vcmp.eq.f32.partialorder %v174, 8.507059e+37
    %v176 = vand.u32 %v164, 2147483648
    %v177 = vor.u32 1.1754944e-38, %v176
    %v178 = vsel %vm175, %v177, %v173
    %v179 = vmul.f32 %v154, %v178
    %v180 = vmin.f32 %v179, 1.0
    %v181 = vmax.f32 %v180, -1.0
    %v182 = vmul.f32 %v141, %v141
    %v183 = vmin.f32 16.0, %v182
    %v184 = vmul.f32 %v183, 2.1237322e-06
    %v185 = vadd.f32 %v184, 0.00028619796
    %v186 = vmul.f32 %v183, %v185
    %v187 = vadd.f32 %v186, 0.0036580483
    %v188 = vmul.f32 %v183, %v187
    %v189 = vadd.f32 %v188, 0.05243302
    %v190 = vmul.f32 %v183, %v189
    %v191 = vadd.f32 %v190, 0.18741608
    %v192 = vmul.f32 %v183, %v191
    %v193 = vadd.f32 %v192, 1.1283791
    %v194 = vmul.f32 %v141, %v193
    %v195 = vmul.f32 %v183, 3.8918573e-05
    %v196 = vadd.f32 %v195, 0.001143296
    %v197 = vmul.f32 %v183, %v196
    %v198 = vadd.f32 %v197, 0.014752088
    %v199 = vmul.f32 %v183, %v198
    %v200 = vadd.f32 %v199, 0.112945676
    %v201 = vmul.f32 %v183, %v200
    %v202 = vadd.f32 %v201, 0.4994258
    %v203 = vmul.f32 %v183, %v202
    %v204 = vadd.f32 %v203, 1.0
    %v205 = vrcp.pop %v204
    %v206 = vmul.f32 %v204, %v205
    %v207 = vsub.f32 1.0, %v206
    %v208 = vmul.f32 %v205, %v207
    %v209 = vadd.f32 %v205, %v208
    %vm210 = vweird.f32 %v204
    %vm211 = vweird.f32 %v205
    %vm212 = vmor %vm210, %vm211
    %v213 = vsel %vm212, %v205, %v209
    %v214 = vand.u32 2147483647, %v204
    %vm215 = vcmp.eq.f32.partialorder %v214, 8.507059e+37
    %v216 = vand.u32 %v204, 2147483648
    %v217 = vor.u32 1.1754944e-38, %v216
    %v218 = vsel %vm215, %v217, %v213
    %v219 = vmul.f32 %v194, %v218
    %v220 = vmin.f32 %v219, 1.0
    %v221 = vmax.f32 %v220, -1.0
    %v222 = vadd.f32 %v181, 1.0
    %v223 = vadd.f32 %v221, 1.0
    %v224 = vmul.f32 %v138, %v222
    %v225 = vmul.f32 %v139, %v223
    %v226 = vld [vmem:[#allocation2] sm:$0xff]
    %v227 = vld [vmem:[#allocation2 + $0x8] sm:$0xff]
    %v228 = vpack.c.bf16 %v225, %v224
    %v229 = vld [vmem:[%s3] sm:$0xf]
    %v230 = vld [vmem:[%s3 + $0x4] sm:$0xf]
    %v231 = vld [vmem:[%s3 + $0x8] sm:$0xf]
    %v232 = vld [vmem:[%s3 + $0xc] sm:$0xf]
    %v237 = vunpack.c.l.b16 %v229
    %v238 = vunpack.c.l.b16 %v230
    %v239 = vunpack.c.l.b16 %v231
    %v240 = vunpack.c.l.b16 %v232
    %v241 = vpack.c.b16 %v238, %v237
    %v242 = vpack.c.b16 %v240, %v239
    %245 = vmatpush.bf16.xpose.msra.mxu0 0
    %246 = vmatpush.bf16.xpose.msra.mxu0 0
    %247 = vmatpush.bf16.xpose.msra.mxu0 0
    %248 = vmatpush.bf16.xpose.msra.mxu0 0
    %249 = vmatpush.bf16.xpose.msra.mxu0 0
    %250 = vmatpush.bf16.xpose.msra.mxu0 0
    %251 = vmatpush.bf16.xpose.msra.mxu0 %v242
    %252 = vmatpush.bf16.xpose.msra.mxu0 %v241
    %253 = vmatmul.bf16.gmra.mxu0 %v228
    %v254 = vpop.f32.mrf.mxu0
    %v255 = vadd.f32 0.0, %v254
    %v256 = vpop.f32.mrf.mxu0
    %v257 = vadd.f32 0.0, %v256
    %258 = vdwg.mxu0
    %v259 = vadd.f32 %v226, %v255
    %v260 = vadd.f32 %v227, %v257
    %261 = vst.msk [vmem:[#allocation2] sm:$0xff] %vm96, %v259
    %262 = vst.msk [vmem:[#allocation2 + $0x8] sm:$0xff] %vm96, %v260
    // Predicated region
    $region26: #{tpu_custom_call.1} parent=1 // pred_check
      %p263 = pneg %p22
    $region27: #{tpu_custom_call.1} parent=1 // pred_check_branch
      %265 = sbr.rel (%p263) target = $region29
    $region28: #{tpu_custom_call.1} parent=1 // pred_region
      %v266 = vld [vmem:[#allocation2] sm:$0xff]
      %v267 = vld [vmem:[#allocation2 + $0x8] sm:$0xff]
      %v268 = vld [vmem:[%s4] sm:$0x1]
      %v270 = vperm.slane %v268, 0
      %v272 = vadd.f32 %v266, %v270
      %v273 = vadd.f32 %v267, %v270
      %274 = vst.msk [vmem:[#allocation3] sm:$0xff] %vm96, %v272
      %275 = vst.msk [vmem:[#allocation3 + $0x8] sm:$0xff] %vm96, %v273
    $region29: #{tpu_custom_call.1} parent=1 // pred_fallthru
      _
    // Predicated region
    $region30: #{tpu_custom_call.1} parent=1 // pred_check
      _
    $region31: #{tpu_custom_call.1} parent=1 // pred_check_branch
      %277 = sbr.rel (0) target = $region33
    $region32: #{tpu_custom_call.1} parent=1 // pred_region
      %279 = vsyncadd [#allocation4], 0
      %s280 = sshll.u32 [#allocation3], 4
      %s281 = int_to_ptr.vmem [resolvable:$true] %s280
      %s282 = sshll.u32 %s5, 4
      %s283 = int_to_ptr.hbm [resolvable:$true] %s282
      %288 = dma.vmem_to_hbm [thread:$0]  %s281, 256, %s283, [#allocation4], 128, 128, 8
    $region33: #{tpu_custom_call.1} parent=1 // pred_fallthru
      _
    // Predicated region
    $region34: #{tpu_custom_call.1} parent=1 // pred_check
      _
    $region35: #{tpu_custom_call.1} parent=1 // pred_check_branch
      %290 = sbr.rel (0) target = $region37
    $region36: #{tpu_custom_call.1} parent=1 // pred_region
      %292 = dma.done [#allocation4], 256
    $region37: #{tpu_custom_call.1} parent=1 // pred_fallthru
      _
    %293 = vsyncpa [#allocation4], 1

</llo_original>
